<compile_context>
chip_gen: v6e
topology: v6e:2x2x1
jax: 0.10.0
libtpu: 0.0.40
codegen_flags: <defaults>
</compile_context>

<pallas_src>
from functools import partial

import jax
import jax.numpy as jnp
from jax.experimental import pallas as pl
from jax.experimental.pallas import tpu as pltpu


# ------------------------------ Pallas kernel --------------------------------
def _make_celoss_kernel(num_class, smooth, one_hot, bce):
    """Row-tiled fused CELoss kernel factory (static flags -> static branches)."""
    uniform = (1.0 - smooth) / num_class          # label smoothing floor

    def kernel(logit_ref, label_ref, row_ref):
        x = logit_ref[...].astype(jnp.float32)                 # (tm, C) f32
        tm, c = x.shape

        # ---- label clip + (optional) one-hot + smoothing ---------------------
        if one_hot:
            lab = label_ref[...]                                # (tm, 1) int32
            lab = jnp.where((lab < 0) | (lab >= num_class), 0, lab)
            cls = jax.lax.broadcasted_iota(jnp.int32, (tm, c), 1)
            soft = jnp.where(cls == lab, smooth + uniform, uniform)
        else:
            lab = label_ref[...].astype(jnp.float32)            # (tm, C) f32
            lab = jnp.where((lab < 0.0) | (lab >= float(num_class)), 0.0, lab)
            soft = lab * smooth + uniform

        # ---- per-row loss -----------------------------------------------------
        if bce:
            cls0 = jax.lax.broadcasted_iota(jnp.int32, (tm, c), 1) == 0
            soft = jnp.where(cls0, 0.0, soft)                   # label[:, :, 0] = 0
            # nn.BCELoss(reduction='none'): -(y*log(x) + (1-y)*log(1-x)),
            # logs clamped at -100 like PyTorch.
            log_x = jnp.maximum(jnp.log(x), -100.0)
            log_1x = jnp.maximum(jnp.log(1.0 - x), -100.0)
            row = -jnp.sum(soft * log_x + (1.0 - soft) * log_1x,
                           axis=-1, keepdims=True)              # (tm, 1)
        else:
            m = jnp.max(x, axis=-1, keepdims=True)
            lse = m + jnp.log(jnp.sum(jnp.exp(x - m), axis=-1, keepdims=True))
            row = jnp.sum((lse - x) * soft, axis=-1, keepdims=True)  # (tm, 1)

        row_ref[...] = row

    return kernel


# ------------------------------ wrapper ---------------------------------------
def _round_up(x, m):
    return ((x + m - 1) // m) * m


@partial(jax.jit, static_argnames=("one_hot", "smooth", "num_class", "bce"))
def celoss_pallas(logit, label, mask, *, one_hot, smooth, num_class, bce=False):
    """CELoss.forward(logit, label, mask, one_hot, smooth, num_class, bce)."""
    B, T, C = logit.shape
    M = B * T

    x = logit.reshape(M, C)                                    # native dtype, no copy
    if one_hot:
        lab = label.reshape(M, 1).astype(jnp.int32)
        lab_row_bytes = 4
    else:
        lab = label.reshape(M, C)                              # native dtype, no copy
        lab_row_bytes = C * lab.dtype.itemsize

    # --- adaptive row-tile: ~4 MiB of input per pipeline buffer ---------------
    row_bytes = C * x.dtype.itemsize + lab_row_bytes + 4       # logits + labels + out
    target = 4 << 20
    tm = max(8, min(2048, (target // row_bytes) // 8 * 8))
    tm = min(tm, _round_up(M, 8))
    grid = pl.cdiv(M, tm)

    if one_hot:
        lab_spec = pl.BlockSpec((tm, 1), lambda i: (i, 0))
    else:
        lab_spec = pl.BlockSpec((tm, C), lambda i: (i, 0))

    # vmem limit from the actual double-buffered footprint (+ f32 working set),
    # kept <= 64 MiB so the kernel always fits a v7x TensorCore.
    tile_in_bytes = tm * row_bytes
    vmem_limit = int(min(max(5 * tile_in_bytes + (4 << 20), 32 << 20), 64 << 20))

    kernel = _make_celoss_kernel(int(num_class), float(smooth), bool(one_hot),
                                 bool(bce))
    row = pl.pallas_call(
        kernel,
        grid=(grid,),
        in_specs=[
            pl.BlockSpec((tm, C), lambda i: (i, 0)),           # logits tile
            lab_spec,                                           # labels tile
        ],
        out_specs=pl.BlockSpec((tm, 1), lambda i: (i, 0)),      # per-row loss
        out_shape=jax.ShapeDtypeStruct((M, 1), jnp.float32),
        compiler_params=pltpu.CompilerParams(
            dimension_semantics=("parallel",),                  # independent tiles
            vmem_limit_bytes=vmem_limit,
        ),
    )(x, lab)

    # loss = (row_loss * mask).sum() / mask.sum().clamp(min=1)   (tiny XLA reduce)
    mk = mask.reshape(M).astype(jnp.float32)
    return jnp.sum(row[:, 0] * mk) / jnp.maximum(jnp.sum(mk), 1.0)


# --------------------------- pure-JAX reference --------------------------------
def celoss_ref(logit, label, mask, one_hot, smooth, num_class, bce=False):
    if one_hot:
        lab = jnp.where((label < 0) | (label >= num_class), 0, label)
        lab = jax.nn.one_hot(lab.astype(jnp.int32), num_class, dtype=jnp.float32)
    else:
        lab = jnp.where((label < 0) | (label >= num_class), 0.0, label)
    lab = lab * smooth + (1.0 - smooth) / num_class
    if bce:
        lab = lab.at[:, :, 0].set(0.0)
        log_x = jnp.maximum(jnp.log(logit), -100.0)
        log_1x = jnp.maximum(jnp.log(1.0 - logit), -100.0)
        loss = -(lab * log_x + (1.0 - lab) * log_1x)
    else:
        loss = -jax.nn.log_softmax(logit.astype(jnp.float32), axis=2) * lab
    loss = loss.sum(axis=2) * mask
    return loss.sum() / jnp.maximum(mask.sum(), 1.0)


# ----------------------------------- main --------------------------------------
if __name__ == "__main__":
    key = jax.random.PRNGKey(0)
    k1, k2, k3 = jax.random.split(key, 3)

    B, T, C = 2, 16, 37                # small shapes; C not a multiple of 128
    smooth = 0.9
    logit = jax.random.normal(k1, (B, T, C), jnp.float32)
    # include out-of-range ids to exercise the label-clipping branch
    label = jax.random.randint(k2, (B, T), -2, C + 2)
    mask = (jax.random.uniform(k3, (B, T)) > 0.25).astype(jnp.float32)

    # --- path 1: one_hot=True, bce=False (standard smoothed CE, f32) ----------
    loss = celoss_pallas(logit, label, mask, one_hot=True, smooth=smooth,
                         num_class=C, bce=False)
    jax.block_until_ready(loss)
    ref = celoss_ref(logit, label, mask, True, smooth, C, False)
    assert jnp.allclose(loss, ref, rtol=1e-4, atol=1e-4), (loss, ref)

    # --- path 2: same, but bf16 logits streamed in native dtype ---------------
    logit16 = logit.astype(jnp.bfloat16)
    loss16 = celoss_pallas(logit16, label, mask, one_hot=True, smooth=smooth,
                           num_class=C, bce=False)
    jax.block_until_ready(loss16)
    ref16 = celoss_ref(logit16.astype(jnp.float32), label, mask, True, smooth,
                       C, False)
    assert jnp.allclose(loss16, ref16, rtol=2e-3, atol=2e-3), (loss16, ref16)

    # --- path 3: one_hot=True, bce=True (probabilities in, BCE loss) ----------
    prob = jax.nn.sigmoid(logit)
    loss_b = celoss_pallas(prob, label, mask, one_hot=True, smooth=smooth,
                           num_class=C, bce=True)
    jax.block_until_ready(loss_b)
    ref_b = celoss_ref(prob, label, mask, True, smooth, C, True)
    assert jnp.allclose(loss_b, ref_b, rtol=1e-4, atol=1e-4), (loss_b, ref_b)

    # --- path 4: one_hot=False (dense label distribution) ---------------------
    dense = jax.nn.one_hot(jnp.clip(label, 0, C - 1), C, dtype=jnp.float32)
    loss_d = celoss_pallas(logit, dense, mask, one_hot=False, smooth=smooth,
                           num_class=C, bce=False)
    jax.block_until_ready(loss_d)
    ref_d = celoss_ref(logit, dense, mask, False, smooth, C, False)
    assert jnp.allclose(loss_d, ref_d, rtol=1e-4, atol=1e-4), (loss_d, ref_d)

    print("KERNEL_OK")
</pallas_src>

<mosaic_0001>
module attributes {stable_mosaic.version = 11 : i64} {
  func.func @kernel(%arg0: i32, %arg1: memref<32x37xf32, #tpu.memory_space<vmem>>, %arg2: memref<32x1xi32, #tpu.memory_space<vmem>>, %arg3: memref<32x1xf32, #tpu.memory_space<vmem>>) attributes {dimension_semantics = [#tpu.dimension_semantics<parallel>], iteration_bounds = array<i64: 1>, scalar_prefetch = 0 : i64, scratch_operands = 0 : i64, tpu.core_type = #tpu.core_type<tc>, window_params = [{transform_indices = @transform_0, window_bounds = array<i64: 32, 37>}, {transform_indices = @transform_1, window_bounds = array<i64: 32, 1>}, {transform_indices = @transform_2, window_bounds = array<i64: 32, 1>}]} {
    %c0 = arith.constant 0 : index
    %c0_0 = arith.constant 0 : index
    %0 = vector.load %arg1[%c0, %c0_0] : memref<32x37xf32, #tpu.memory_space<vmem>>, vector<32x37xf32>
    %c0_1 = arith.constant 0 : index
    %c0_2 = arith.constant 0 : index
    %1 = vector.load %arg2[%c0_1, %c0_2] : memref<32x1xi32, #tpu.memory_space<vmem>>, vector<32x1xi32>
    %c0_i32 = arith.constant 0 : i32
    %2 = vector.broadcast %c0_i32 : i32 to vector<32x1xi32>
    %3 = arith.cmpi slt, %1, %2 : vector<32x1xi32>
    %c37_i32 = arith.constant 37 : i32
    %4 = vector.broadcast %c37_i32 : i32 to vector<32x1xi32>
    %5 = arith.cmpi sge, %1, %4 : vector<32x1xi32>
    %6 = arith.ori %3, %5 : vector<32x1xi1>
    %c0_i32_3 = arith.constant 0 : i32
    %7 = vector.broadcast %c0_i32_3 : i32 to vector<32x1xi32>
    %8 = arith.select %6, %7, %1 : vector<32x1xi1>, vector<32x1xi32>
    %9 = tpu.iota {dimensions = array<i32: 1>} : vector<32x37xi32>
    %10 = vector.broadcast %8 : vector<32x1xi32> to vector<32x37xi32>
    %11 = arith.cmpi eq, %9, %10 : vector<32x37xi32>
    %cst = arith.constant 0.902702689 : f32
    %cst_4 = arith.constant 0.00270270277 : f32
    %12 = vector.broadcast %cst : f32 to vector<32x37xf32>
    %13 = vector.broadcast %cst_4 : f32 to vector<32x37xf32>
    %14 = arith.select %11, %12, %13 : vector<32x37xi1>, vector<32x37xf32>
    %cst_5 = arith.constant dense<0xFF800000> : vector<32xf32>
    %15 = vector.multi_reduction <maximumf>, %0, %cst_5 [1] : vector<32x37xf32> to vector<32xf32>
    %16 = vector.shape_cast %15 : vector<32xf32> to vector<32x1xf32>
    %17 = vector.broadcast %16 : vector<32x1xf32> to vector<32x37xf32>
    %18 = arith.subf %0, %17 : vector<32x37xf32>
    %19 = math.exp %18 : vector<32x37xf32>
    %cst_6 = arith.constant dense<0.000000e+00> : vector<32xf32>
    %20 = vector.multi_reduction <add>, %19, %cst_6 [1] : vector<32x37xf32> to vector<32xf32>
    %21 = vector.shape_cast %20 : vector<32xf32> to vector<32x1xf32>
    %22 = math.log %21 : vector<32x1xf32>
    %23 = arith.addf %16, %22 : vector<32x1xf32>
    %24 = vector.broadcast %23 : vector<32x1xf32> to vector<32x37xf32>
    %25 = arith.subf %24, %0 : vector<32x37xf32>
    %26 = arith.mulf %25, %14 : vector<32x37xf32>
    %cst_7 = arith.constant dense<0.000000e+00> : vector<32xf32>
    %27 = vector.multi_reduction <add>, %26, %cst_7 [1] : vector<32x37xf32> to vector<32xf32>
    %28 = vector.shape_cast %27 : vector<32xf32> to vector<32x1xf32>
    %c0_8 = arith.constant 0 : index
    %c0_9 = arith.constant 0 : index
    %29 = vector.load %arg3[%c0_8, %c0_9] : memref<32x1xf32, #tpu.memory_space<vmem>>, vector<32x1xf32>
    tpu.vector_store %arg3[%c0_8, %c0_9], %28 {strides = array<i32>} : memref<32x1xf32, #tpu.memory_space<vmem>>, vector<32x1xf32>,
    return
  }
  func.func @transform_0(%arg0: i32) -> (i32, i32) {
    %c0_i32 = arith.constant 0 : i32
    %c0_i32_0 = arith.constant 0 : i32
    return %arg0, %c0_i32 : i32, i32
  }
  func.func @transform_1(%arg0: i32) -> (i32, i32) {
    %c0_i32 = arith.constant 0 : i32
    %c0_i32_0 = arith.constant 0 : i32
    return %arg0, %c0_i32 : i32, i32
  }
  func.func @transform_2(%arg0: i32) -> (i32, i32) {
    %c0_i32 = arith.constant 0 : i32
    %c0_i32_0 = arith.constant 0 : i32
    return %arg0, %c0_i32 : i32, i32
  }
}

</mosaic_0001>

<llo_original>
// kernel: celoss_pallas.1
$region0: #{celoss_pallas.1}
  #allocation0 [shape = 'u32[]', space=smem, size = 0x4, offset = 0x4, fixed_abs, tag = 'smem constant byte address 0x4 - core index']
  #allocation1 [shape = 'u32[144,128]{1,0:T(1,128)}', space=vmem, size = 0x12000, scoped, tag = 'internal scratch']
  %s0 = inlined_call_operand.vmem [shape: f32[32,37], index: 0, kind: input, shape index: {}]
  %s1 = inlined_call_operand.vmem [shape: s32[32,1], index: 1, kind: input, shape index: {}]
  %s2 = inlined_call_operand.vmem [shape: f32[32,1], index: 2, kind: output, shape index: {}]
  %s3 = sld [smem:[#allocation0]]
  $region18: #{celoss_pallas.1} parent=0
    _
  %s5 = ssub.s32 1, %s3
  %s6 = scalar_select 0, %s5, %s3
  // Predicated region
  $region2: #{celoss_pallas.1} parent=0 // pred_check
    _
  $region3: #{celoss_pallas.1} parent=0 // pred_check_branch
    %8 = sbr.rel (0) target = $region5
  $region4: #{celoss_pallas.1} parent=0 // pred_region
    _
  $region5: #{celoss_pallas.1} parent=0 // pred_fallthru
    _
  // Predicated region
  $region6: #{celoss_pallas.1} parent=0 // pred_check
    _
  $region7: #{celoss_pallas.1} parent=0 // pred_check_branch
    %10 = sbr.rel (0) target = $region9
  $region8: #{celoss_pallas.1} parent=0 // pred_region
    _
  $region9: #{celoss_pallas.1} parent=0 // pred_fallthru
    _
  %v11 = vld [vmem:[%s0] sm:$0xff]
  %v12 = vld [vmem:[%s0 + $0x8] sm:$0xff]
  %v13 = vld [vmem:[%s0 + $0x10] sm:$0xff]
  %v14 = vld [vmem:[%s0 + $0x18] sm:$0xff]
  %v15 = vld [vmem:[%s1] sm:$0xff]
  %v16 = vld [vmem:[%s1 + $0x8] sm:$0xff]
  %v17 = vld [vmem:[%s1 + $0x10] sm:$0xff]
  %v18 = vld [vmem:[%s1 + $0x18] sm:$0xff]
  %vm19 = vcmp.lt.s32.totalorder %v15, 0
  %vm20 = vcmp.lt.s32.totalorder %v16, 0
  %vm21 = vcmp.lt.s32.totalorder %v17, 0
  %vm22 = vcmp.lt.s32.totalorder %v18, 0
  %vm23 = vcmp.ge.s32.totalorder %v15, 37
  %vm24 = vcmp.ge.s32.totalorder %v16, 37
  %vm25 = vcmp.ge.s32.totalorder %v17, 37
  %vm26 = vcmp.ge.s32.totalorder %v18, 37
  %vm27 = vmor %vm19, %vm23
  %vm28 = vmor %vm20, %vm24
  %vm29 = vmor %vm21, %vm25
  %vm30 = vmor %vm22, %vm26
  %v31 = vsel %vm27, 0, %v15
  %v32 = vsel %vm28, 0, %v16
  %v33 = vsel %vm29, 0, %v17
  %v34 = vsel %vm30, 0, %v18
  %v35 = vlaneseq
  %v36 = vand.u32 %v35, 127
  %37 = vset.pattern.permute.xlu0 0
  %38 = vperm.xlu0 %37, %v31
  %v39 = vpop.permute.xlu0 %38
  %40 = vset.pattern.permute.xlu0 0
  %41 = vperm.xlu0 %40, %v32
  %v42 = vpop.permute.xlu0 %41
  %43 = vset.pattern.permute.xlu0 0
  %44 = vperm.xlu0 %43, %v33
  %v45 = vpop.permute.xlu0 %44
  %46 = vset.pattern.permute.xlu0 0
  %47 = vperm.xlu0 %46, %v34
  %v48 = vpop.permute.xlu0 %47
  %vm49 = vcmp.eq.s32.totalorder %v36, %v39
  %vm50 = vcmp.eq.s32.totalorder %v36, %v42
  %vm51 = vcmp.eq.s32.totalorder %v36, %v45
  %vm52 = vcmp.eq.s32.totalorder %v36, %v48
  %v53 = vsel %vm49, 0.9027027, 0.0027027028
  %v54 = vsel %vm50, 0.9027027, 0.0027027028
  %v55 = vsel %vm51, 0.9027027, 0.0027027028
  %v56 = vsel %vm52, 0.9027027, 0.0027027028
  %vm57 = vcmask 302080
  %v58 = vsel %vm57, %v11, -inf
  %59 = vmax.xlane.f32.xlu0 %v58
  %v60 = vpop.xlane.xlu0 %59
  %v61 = vsel %vm57, %v12, -inf
  %62 = vmax.xlane.f32.xlu0 %v61
  %v63 = vpop.xlane.xlu0 %62
  %v64 = vsel %vm57, %v13, -inf
  %65 = vmax.xlane.f32.xlu0 %v64
  %v66 = vpop.xlane.xlu0 %65
  %v67 = vsel %vm57, %v14, -inf
  %68 = vmax.xlane.f32.xlu0 %v67
  %v69 = vpop.xlane.xlu0 %68
  %v70 = vsub.f32 %v11, %v60
  %v71 = vsub.f32 %v12, %v63
  %v72 = vsub.f32 %v13, %v66
  %v73 = vsub.f32 %v14, %v69
  %v74 = vmul.f32 %v70, 1.442695
  %v75 = vpow.pop %v74
  %v76 = vmul.f32 %v71, 1.442695
  %v77 = vpow.pop %v76
  %v78 = vmul.f32 %v72, 1.442695
  %v79 = vpow.pop %v78
  %v80 = vmul.f32 %v73, 1.442695
  %v81 = vpow.pop %v80
  %v82 = vsel %vm57, %v75, 0.0
  %83 = vadd.xlane.f32.xlu0 %v82
  %v84 = vpop.xlane.xlu0 %83
  %v85 = vsel %vm57, %v77, 0.0
  %86 = vadd.xlane.f32.xlu0 %v85
  %v87 = vpop.xlane.xlu0 %86
  %v88 = vsel %vm57, %v79, 0.0
  %89 = vadd.xlane.f32.xlu0 %v88
  %v90 = vpop.xlane.xlu0 %89
  %v91 = vsel %vm57, %v81, 0.0
  %92 = vadd.xlane.f32.xlu0 %v91
  %v93 = vpop.xlane.xlu0 %92
  %v94 = vlog2.pop %v84
  %v95 = vmul.f32 %v94, 0.6931472
  %v96 = vlog2.pop %v87
  %v97 = vmul.f32 %v96, 0.6931472
  %v98 = vlog2.pop %v90
  %v99 = vmul.f32 %v98, 0.6931472
  %v100 = vlog2.pop %v93
  %v101 = vmul.f32 %v100, 0.6931472
  %v102 = vadd.f32 %v60, %v95
  %v103 = vadd.f32 %v63, %v97
  %v104 = vadd.f32 %v66, %v99
  %v105 = vadd.f32 %v69, %v101
  %v106 = vsub.f32 %v102, %v11
  %v107 = vsub.f32 %v103, %v12
  %v108 = vsub.f32 %v104, %v13
  %v109 = vsub.f32 %v105, %v14
  %v110 = vmul.f32 %v106, %v53
  %v111 = vmul.f32 %v107, %v54
  %v112 = vmul.f32 %v108, %v55
  %v113 = vmul.f32 %v109, %v56
  %v114 = vsel %vm57, %v110, 0.0
  %115 = vadd.xlane.f32.xlu0 %v114
  %v116 = vpop.xlane.xlu0 %115
  %v117 = vsel %vm57, %v111, 0.0
  %118 = vadd.xlane.f32.xlu0 %v117
  %v119 = vpop.xlane.xlu0 %118
  %v120 = vsel %vm57, %v112, 0.0
  %121 = vadd.xlane.f32.xlu0 %v120
  %v122 = vpop.xlane.xlu0 %121
  %v123 = vsel %vm57, %v113, 0.0
  %124 = vadd.xlane.f32.xlu0 %v123
  %v125 = vpop.xlane.xlu0 %124
  %vm126 = vcmask 7168
  %127 = vst.msk [vmem:[%s2] sm:$0xff] %vm126, %v116
  %128 = vst.msk [vmem:[%s2 + $0x8] sm:$0xff] %vm126, %v119
  %129 = vst.msk [vmem:[%s2 + $0x10] sm:$0xff] %vm126, %v122
  %130 = vst.msk [vmem:[%s2 + $0x18] sm:$0xff] %vm126, %v125
  // Predicated region
  $region10: #{celoss_pallas.1} parent=0 // pred_check
    _
  $region11: #{celoss_pallas.1} parent=0 // pred_check_branch
    %132 = sbr.rel (0) target = $region13
  $region12: #{celoss_pallas.1} parent=0 // pred_region
    _
  $region13: #{celoss_pallas.1} parent=0 // pred_fallthru
    _
  // Predicated region
  $region14: #{celoss_pallas.1} parent=0 // pred_check
    _
  $region15: #{celoss_pallas.1} parent=0 // pred_check_branch
    %134 = sbr.rel (0) target = $region17
  $region16: #{celoss_pallas.1} parent=0 // pred_region
    _
  $region17: #{celoss_pallas.1} parent=0 // pred_fallthru
    _

</llo_original>
